<compile_context>
chip_gen: v7x
topology: tpu7x:2x2x1
jax: 0.10.0
libtpu: 0.0.40
codegen_flags: <defaults>
</compile_context>

<pallas_src>
import math
import functools

import jax
import jax.numpy as jnp
from jax.experimental import pallas as pl
from jax.experimental.pallas import tpu as pltpu

# cos(m*theta) as a polynomial of cos(theta) — same list as the PyTorch module.
_MLAMBDA = [
    lambda x: x ** 0,
    lambda x: x ** 1,
    lambda x: 2 * x ** 2 - 1,
    lambda x: 4 * x ** 3 - 3 * x,
    lambda x: 8 * x ** 4 - 8 * x ** 2 + 1,
    lambda x: 16 * x ** 5 - 20 * x ** 3 + 5 * x,
]

_PI_CONST = 3.14159265  # exact constant used by the PyTorch module


def _sphere_kernel(lamb_ref, x_ref, label_ref, w_ref, out_ref, *, margin, k_thresholds):
    inv_lamb = lamb_ref[0, 0]                       # 1 / (1 + lamb), SMEM scalar

    x = x_ref[...].astype(jnp.float32)              # (B, D)  resident across grid
    w = w_ref[...].astype(jnp.float32)              # (TILE_C, D) streamed per step
    labels = label_ref[...]                         # (B, 1) int32

    # F.normalize(dim=1) via rsqrt (no per-element divides).
    #   xn = x / max(||x||, 1e-12)   ;   x_norm = ||x||_2 (torch.norm, no eps)
    x_sq = jnp.sum(x * x, axis=1, keepdims=True)    # (B, 1)
    x_inv = jax.lax.rsqrt(jnp.maximum(x_sq, 1e-24))
    xn = x * x_inv
    x_norm = x_sq * x_inv                           # sumsq * rsqrt(sumsq) == sqrt(sumsq)

    w_sq = jnp.sum(w * w, axis=1, keepdims=True)    # (TILE_C, 1)
    w_inv = jax.lax.rsqrt(jnp.maximum(w_sq, 1e-24))
    wn = w * w_inv

    # cos_theta = normalize(x) @ normalize(w).T — contract on D directly, the MXU
    # consumes the "transposed" operand natively (no XLU transpose / temporary).
    cos_theta = jax.lax.dot_general(
        xn, wn,
        dimension_numbers=(((1,), (1,)), ((), ())),
        preferred_element_type=jnp.float32,
    )                                               # (B, TILE_C)
    cos_theta = jnp.clip(cos_theta, -1.0, 1.0)

    cos_m_theta = _MLAMBDA[margin](cos_theta)

    # k = floor(margin * acos(cos_theta) / PI_CONST), acos-free:
    #   k >= j  <=>  acos(x) >= j*PI/margin  <=>  x <= cos(j*PI/margin)
    k = jnp.zeros_like(cos_theta)
    for thr in k_thresholds:
        k = k + (cos_theta <= thr).astype(jnp.float32)

    sign = jnp.where(jnp.mod(k, 2.0) == 0.0, 1.0, -1.0)   # (-1)^k for integer k
    phi_theta = sign * cos_m_theta - 2.0 * k

    # one_hot.scatter_(1, label, 1) fused into a select; lane iota offset by this
    # tile's column start so the margin term lands in the correct global column.
    tile_c = cos_theta.shape[1]
    col = (jax.lax.broadcasted_iota(jnp.int32, cos_theta.shape, 1)
           + pl.program_id(0) * tile_c)
    out = jnp.where(col == labels,
                    cos_theta + (phi_theta - cos_theta) * inv_lamb,
                    cos_theta)
    out_ref[...] = (out * x_norm).astype(out_ref.dtype)   # NormOfFeature.view(-1, 1)


def sphere_product(x, weight, label, *, margin=2, iteration=1, tile_c=128):
    """Forward pass of SphereProduct. `iteration` emulates self.iter (1 = first call)."""
    B, D = x.shape
    C, D2 = weight.shape
    assert D == D2 and label.shape == (B,)
    assert margin < 6

    base, gamma, power, lambda_min = 1000.0, 0.12, 1, 5.0
    lamb = max(lambda_min, base * (1.0 + gamma * iteration) ** (-power))
    # Scalar in SMEM (not a closure constant) -> no retrace/recompile per iteration.
    inv_lamb = jnp.full((1, 1), 1.0 / (1.0 + lamb), dtype=jnp.float32)

    # thresholds cos(j * PI_CONST / margin), j = 1..margin (acos-free floor(k))
    k_thresholds = tuple(math.cos(j * _PI_CONST / margin) for j in range(1, margin + 1))

    # Pad the class dim to a lane-dense multiple of tile_c (unmasked vst stores).
    # Padded weight rows are all-zero -> cos_theta == 0 there; sliced off below.
    num_tiles = pl.cdiv(C, tile_c)
    c_pad = num_tiles * tile_c
    if c_pad != C:
        weight = jnp.pad(weight, ((0, c_pad - C), (0, 0)))

    label2d = label.reshape(B, 1).astype(jnp.int32)

    kernel = functools.partial(_sphere_kernel, margin=margin, k_thresholds=k_thresholds)

    out = pl.pallas_call(
        kernel,
        out_shape=jax.ShapeDtypeStruct((B, c_pad), x.dtype),
        grid=(num_tiles,),
        in_specs=[
            pl.BlockSpec(memory_space=pltpu.MemorySpace.SMEM),        # inv_lamb (1,1)
            pl.BlockSpec((B, D), lambda j: (0, 0)),                   # x, resident
            pl.BlockSpec((B, 1), lambda j: (0, 0)),                   # label, resident
            pl.BlockSpec((tile_c, D), lambda j: (j, 0)),              # weight tile
        ],
        out_specs=pl.BlockSpec((B, tile_c), lambda j: (0, j)),
        compiler_params=pltpu.CompilerParams(
            dimension_semantics=("parallel",),                        # megacore on v7x
        ),
    )(inv_lamb, x, label2d, weight)

    return out[:, :C]


def _reference(x, weight, label, *, margin=2, iteration=1):
    """Pure-JAX reference mirroring the PyTorch forward."""
    lamb = max(5.0, 1000.0 * (1.0 + 0.12 * iteration) ** (-1))
    xn = x / jnp.maximum(jnp.linalg.norm(x, axis=1, keepdims=True), 1e-12)
    wn = weight / jnp.maximum(jnp.linalg.norm(weight, axis=1, keepdims=True), 1e-12)
    cos_theta = jnp.clip(xn @ wn.T, -1.0, 1.0)
    cos_m_theta = _MLAMBDA[margin](cos_theta)
    theta = jnp.arccos(cos_theta)
    k = jnp.floor(margin * theta / _PI_CONST)
    sign = jnp.where(jnp.mod(k, 2.0) == 0.0, 1.0, -1.0)
    phi_theta = sign * cos_m_theta - 2.0 * k
    norm = jnp.linalg.norm(x, axis=1)
    one_hot = jax.nn.one_hot(label, weight.shape[0], dtype=x.dtype)
    out = one_hot * (phi_theta - cos_theta) / (1.0 + lamb) + cos_theta
    return out * norm[:, None]


if __name__ == "__main__":
    # Small demo shapes (still exercises tiling: C=200 -> 2 class tiles of 128).
    B, in_features, out_features = 8, 64, 200
    key = jax.random.PRNGKey(0)
    kx, kw, kl = jax.random.split(key, 3)

    x = jax.random.normal(kx, (B, in_features), dtype=jnp.float32)
    label = jax.random.randint(kl, (B,), 0, out_features, dtype=jnp.int32)

    # nn.init.xavier_uniform on weight of shape (out_features, in_features)
    bound = math.sqrt(6.0 / (in_features + out_features))
    weight = jax.random.uniform(
        kw, (out_features, in_features), dtype=jnp.float32, minval=-bound, maxval=bound
    )

    out = sphere_product(x, weight, label, margin=2, iteration=1)
    out = jax.block_until_ready(out)

    ref = _reference(x, weight, label, margin=2, iteration=1)
    assert out.shape == (B, out_features)
    assert jnp.allclose(out, ref, atol=2e-5, rtol=1e-5), "mismatch vs reference"
    print("KERNEL_OK")
</pallas_src>

<mosaic_0001>
module attributes {stable_mosaic.version = 11 : i64} {
  func.func @_sphere_kernel(%arg0: i32, %arg1: memref<1x1xf32, #tpu.memory_space<smem>>, %arg2: memref<8x64xf32, #tpu.memory_space<vmem>>, %arg3: memref<8x1xi32, #tpu.memory_space<vmem>>, %arg4: memref<128x64xf32, #tpu.memory_space<vmem>>, %arg5: memref<8x128xf32, #tpu.memory_space<vmem>>) attributes {dimension_semantics = [#tpu.dimension_semantics<parallel>], iteration_bounds = array<i64: 2>, scalar_prefetch = 0 : i64, scratch_operands = 0 : i64, tpu.core_type = #tpu.core_type<tc>, window_params = [{transform_indices = @transform_0, window_bounds = array<i64: 1, 1>}, {pipeline_mode = #tpu.pipeline_mode<synchronous>, transform_indices = @transform_1, window_bounds = array<i64: 8, 64>}, {pipeline_mode = #tpu.pipeline_mode<synchronous>, transform_indices = @transform_2, window_bounds = array<i64: 8, 1>}, {transform_indices = @transform_3, window_bounds = array<i64: 128, 64>}, {transform_indices = @transform_4, window_bounds = array<i64: 8, 128>}]} {
    %c0 = arith.constant 0 : index
    %c0_0 = arith.constant 0 : index
    %0 = memref.load %arg1[%c0, %c0_0] : memref<1x1xf32, #tpu.memory_space<smem>>
    %c0_1 = arith.constant 0 : index
    %c0_2 = arith.constant 0 : index
    %1 = vector.load %arg2[%c0_1, %c0_2] : memref<8x64xf32, #tpu.memory_space<vmem>>, vector<8x64xf32>
    %c0_3 = arith.constant 0 : index
    %c0_4 = arith.constant 0 : index
    %2 = vector.load %arg4[%c0_3, %c0_4] : memref<128x64xf32, #tpu.memory_space<vmem>>, vector<128x64xf32>
    %c0_5 = arith.constant 0 : index
    %c0_6 = arith.constant 0 : index
    %3 = vector.load %arg3[%c0_5, %c0_6] : memref<8x1xi32, #tpu.memory_space<vmem>>, vector<8x1xi32>
    %4 = arith.mulf %1, %1 : vector<8x64xf32>
    %cst = arith.constant dense<0.000000e+00> : vector<8xf32>
    %5 = vector.multi_reduction <add>, %4, %cst [1] : vector<8x64xf32> to vector<8xf32>
    %6 = vector.shape_cast %5 : vector<8xf32> to vector<8x1xf32>
    %cst_7 = arith.constant 1.000000e-24 : f32
    %7 = vector.broadcast %cst_7 : f32 to vector<8x1xf32>
    %8 = arith.maximumf %6, %7 : vector<8x1xf32>
    %9 = math.rsqrt %8 : vector<8x1xf32>
    %10 = vector.broadcast %9 : vector<8x1xf32> to vector<8x64xf32>
    %11 = arith.mulf %1, %10 : vector<8x64xf32>
    %12 = arith.mulf %6, %9 : vector<8x1xf32>
    %13 = arith.mulf %2, %2 : vector<128x64xf32>
    %cst_8 = arith.constant dense<0.000000e+00> : vector<128xf32>
    %14 = vector.multi_reduction <add>, %13, %cst_8 [1] : vector<128x64xf32> to vector<128xf32>
    %15 = vector.shape_cast %14 : vector<128xf32> to vector<128x1xf32>
    %cst_9 = arith.constant 1.000000e-24 : f32
    %16 = vector.broadcast %cst_9 : f32 to vector<128x1xf32>
    %17 = arith.maximumf %15, %16 : vector<128x1xf32>
    %18 = math.rsqrt %17 : vector<128x1xf32>
    %19 = vector.broadcast %18 : vector<128x1xf32> to vector<128x64xf32>
    %20 = arith.mulf %2, %19 : vector<128x64xf32>
    %cst_10 = arith.constant dense<0.000000e+00> : vector<8x128xf32>
    %21 = tpu.matmul %11, %20, %cst_10 {dimension_numbers = #tpu.dot_dimension_numbers<[1], [1], [0], [0], [0, 0, 1, 0], [], []>} : vector<8x64xf32>, vector<128x64xf32>, vector<8x128xf32> -> vector<8x128xf32>
    %cst_11 = arith.constant -1.000000e+00 : f32
    %cst_12 = arith.constant 1.000000e+00 : f32
    %22 = vector.broadcast %cst_11 : f32 to vector<8x128xf32>
    %23 = arith.maximumf %22, %21 : vector<8x128xf32>
    %24 = vector.broadcast %cst_12 : f32 to vector<8x128xf32>
    %25 = arith.minimumf %24, %23 : vector<8x128xf32>
    %26 = arith.mulf %25, %25 : vector<8x128xf32>
    %cst_13 = arith.constant 2.000000e+00 : f32
    %27 = vector.broadcast %cst_13 : f32 to vector<8x128xf32>
    %28 = arith.mulf %27, %26 : vector<8x128xf32>
    %cst_14 = arith.constant 1.000000e+00 : f32
    %29 = vector.broadcast %cst_14 : f32 to vector<8x128xf32>
    %30 = arith.subf %28, %29 : vector<8x128xf32>
    %cst_15 = arith.constant 0.000000e+00 : f32
    %31 = vector.broadcast %cst_15 : f32 to vector<8x128xf32>
    %cst_16 = arith.constant 1.79489656E-9 : f32
    %32 = vector.broadcast %cst_16 : f32 to vector<8x128xf32>
    %33 = arith.cmpf ole, %25, %32 : vector<8x128xf32>
    %34 = arith.extui %33 : vector<8x128xi1> to vector<8x128xi32>
    %35 = arith.sitofp %34 : vector<8x128xi32> to vector<8x128xf32>
    %36 = arith.addf %31, %35 : vector<8x128xf32>
    %cst_17 = arith.constant -1.000000e+00 : f32
    %37 = vector.broadcast %cst_17 : f32 to vector<8x128xf32>
    %38 = arith.cmpf ole, %25, %37 : vector<8x128xf32>
    %39 = arith.extui %38 : vector<8x128xi1> to vector<8x128xi32>
    %40 = arith.sitofp %39 : vector<8x128xi32> to vector<8x128xf32>
    %41 = arith.addf %36, %40 : vector<8x128xf32>
    %cst_18 = arith.constant 2.000000e+00 : f32
    %42 = vector.broadcast %cst_18 : f32 to vector<8x128xf32>
    %43 = arith.remf %41, %42 : vector<8x128xf32>
    %cst_19 = arith.constant 0.000000e+00 : f32
    %44 = vector.broadcast %cst_19 : f32 to vector<8x128xf32>
    %45 = arith.cmpf one, %43, %44 : vector<8x128xf32>
    %cst_20 = arith.constant 0.000000e+00 : f32
    %46 = vector.broadcast %cst_20 : f32 to vector<8x128xf32>
    %47 = arith.cmpf olt, %43, %46 : vector<8x128xf32>
    %cst_21 = arith.constant 0.000000e+00 : f32
    %48 = arith.cmpf olt, %cst_18, %cst_21 : f32
    %49 = vector.broadcast %48 : i1 to vector<8x128xi1>
    %50 = vector.broadcast %49 : vector<8x128xi1> to vector<8x128xi1>
    %51 = arith.xori %47, %50 : vector<8x128xi1>
    %52 = arith.andi %51, %45 : vector<8x128xi1>
    %53 = vector.broadcast %cst_18 : f32 to vector<8x128xf32>
    %54 = arith.addf %43, %53 : vector<8x128xf32>
    %55 = arith.select %52, %54, %43 : vector<8x128xi1>, vector<8x128xf32>
    %cst_22 = arith.constant 0.000000e+00 : f32
    %56 = vector.broadcast %cst_22 : f32 to vector<8x128xf32>
    %57 = arith.cmpf oeq, %55, %56 : vector<8x128xf32>
    %cst_23 = arith.constant 1.000000e+00 : f32
    %cst_24 = arith.constant -1.000000e+00 : f32
    %58 = vector.broadcast %cst_23 : f32 to vector<8x128xf32>
    %59 = vector.broadcast %cst_24 : f32 to vector<8x128xf32>
    %60 = arith.select %57, %58, %59 : vector<8x128xi1>, vector<8x128xf32>
    %61 = arith.mulf %60, %30 : vector<8x128xf32>
    %cst_25 = arith.constant 2.000000e+00 : f32
    %62 = vector.broadcast %cst_25 : f32 to vector<8x128xf32>
    %63 = arith.mulf %62, %41 : vector<8x128xf32>
    %64 = arith.subf %61, %63 : vector<8x128xf32>
    %65 = tpu.iota {dimensions = array<i32: 1>} : vector<8x128xi32>
    %c128_i32 = arith.constant 128 : i32
    %66 = arith.muli %arg0, %c128_i32 : i32
    %67 = vector.broadcast %66 : i32 to vector<8x128xi32>
    %68 = arith.addi %65, %67 : vector<8x128xi32>
    %69 = vector.broadcast %3 : vector<8x1xi32> to vector<8x128xi32>
    %70 = arith.cmpi eq, %68, %69 : vector<8x128xi32>
    %71 = arith.subf %64, %25 : vector<8x128xf32>
    %72 = vector.broadcast %0 : f32 to vector<8x128xf32>
    %73 = arith.mulf %71, %72 : vector<8x128xf32>
    %74 = arith.addf %25, %73 : vector<8x128xf32>
    %75 = arith.select %70, %74, %25 : vector<8x128xi1>, vector<8x128xf32>
    %76 = vector.broadcast %12 : vector<8x1xf32> to vector<8x128xf32>
    %77 = arith.mulf %75, %76 : vector<8x128xf32>
    %c0_26 = arith.constant 0 : index
    %c0_27 = arith.constant 0 : index
    %78 = vector.load %arg5[%c0_26, %c0_27] : memref<8x128xf32, #tpu.memory_space<vmem>>, vector<8x128xf32>
    tpu.vector_store %arg5[%c0_26, %c0_27], %77 {strides = array<i32>} : memref<8x128xf32, #tpu.memory_space<vmem>>, vector<8x128xf32>,
    return
  }
  func.func @transform_0(%arg0: i32) -> (i32, i32) {
    %c0_i32 = arith.constant 0 : i32
    %c0_i32_0 = arith.constant 0 : i32
    %c0_i32_1 = arith.constant 0 : i32
    return %c0_i32, %c0_i32_0 : i32, i32
  }
  func.func @transform_1(%arg0: i32) -> (i32, i32) {
    %c0_i32 = arith.constant 0 : i32
    %c0_i32_0 = arith.constant 0 : i32
    %c0_i32_1 = arith.constant 0 : i32
    return %c0_i32, %c0_i32_0 : i32, i32
  }
  func.func @transform_2(%arg0: i32) -> (i32, i32) {
    %c0_i32 = arith.constant 0 : i32
    %c0_i32_0 = arith.constant 0 : i32
    %c0_i32_1 = arith.constant 0 : i32
    return %c0_i32, %c0_i32_0 : i32, i32
  }
  func.func @transform_3(%arg0: i32) -> (i32, i32) {
    %c0_i32 = arith.constant 0 : i32
    %c0_i32_0 = arith.constant 0 : i32
    return %arg0, %c0_i32 : i32, i32
  }
  func.func @transform_4(%arg0: i32) -> (i32, i32) {
    %c0_i32 = arith.constant 0 : i32
    %c0_i32_0 = arith.constant 0 : i32
    return %c0_i32, %arg0 : i32, i32
  }
}

</mosaic_0001>

<llo_original>
// kernel: tpu_custom_call.1
$region0: #{tpu_custom_call.1}
  #allocation0 [shape = 'u32[]', space=smem, size = 0x4, offset = 0x4, fixed_abs, tag = 'smem constant byte address 0x4 - core index']
  #allocation1 [shape = 'u32[144,128]{1,0:T(1,128)}', space=vmem, size = 0x12000, scoped, tag = 'internal scratch']
  #allocation2 [shape = 'f32[1,1]{1,0:T(1,128)S(6)}', space=smem, size = 0x200, scoped, tag = 'scoped memory for tpu_custom_call.1']
  %s0 = inlined_call_operand.<no memory space> [shape: f32[1,1], index: 0, kind: input, shape index: {}]
  %s1 = inlined_call_operand.vmem [shape: f32[8,64], index: 1, kind: input, shape index: {}]
  %s2 = inlined_call_operand.vmem [shape: s32[8,1], index: 2, kind: input, shape index: {}]
  %s3 = inlined_call_operand.vmem [shape: f32[256,64], index: 3, kind: input, shape index: {}]
  %s4 = inlined_call_operand.hbm [shape: f32[8,256], index: 4, kind: output, shape index: {}]
  %s5 = sld [smem:[#allocation0]]
  $region49: #{tpu_custom_call.1} parent=0
    _
  %s7 = ssub.s32 1, %s5
  %s8 = scalar_select 0, %s7, %s5
  %9 = sst [smem:[#allocation2]] %s0
  $region1: #{tpu_custom_call.1} parent=0
    #allocation3 [shape = 'u8[8192]{0}', space=vmem, size = 0x2000, scoped, tag = 'output window, operand 0']
    #allocation4 [shape = 's32[2]{0}', space=sflag, size = 0x8, scoped, tag = 'scoped memory for tpu_custom_call.1']
    %10 = vsyncpa [#allocation4], 0
    %s11 = scalar_lea.sflag [#allocation4], 1
    %12 = vsyncpa %s11, 0
    loop: start=0, step=1, limit=4
    $region2: #{tpu_custom_call.1} parent=1 // loop_pre_header
      _
    $region3: #{tpu_custom_call.1} parent=1 // loop_header
      %s14 = sphi 0, %s18
      %p15 = scmp.ge.s32.totalorder %s14, 4
      %s22 = sphi 0, %s22
      %s24 = sphi 0, %s22
      %s25 = sphi 0, %s24
      %s39 = sphi 0, %s25
      %s43 = sphi 0, %s43
      %s45 = sphi 0, %s43
      %s46 = sphi 0, %s45
      %s60 = sphi 0, %s46
      %s64 = sphi 0, %s64
      %s66 = sphi 0, %s64
      %s67 = sphi 0, %s66
      %s81 = sphi 0, %s67
      %s87 = sphi 0, %s89
      %s90 = sphi 0, %s87
      %s91 = sphi 0, %s90
      %s107 = sphi 0, %s91
      %s113 = sphi 0, %s115
      %s116 = sphi 0, %s113
      %s117 = sphi 0, %s116
      %s133 = sphi 0, %s117
    $region4: #{tpu_custom_call.1} parent=1 // loop_header_branch
      %17 = sbr.rel (%p15) target = $region8
    $region5: #{tpu_custom_call.1} parent=1 // loop_body
      %s19 = ssub.s32 %s14, 1
      %s20 = ssub.s32 %s14, 2
      %s21 = sadd.s32 %s14, 1
      %s23 = sadd.s32 %s22, 1
      %p26 = scmp.eq.s32.totalorder %s14, 1
      %p27 = scmp.ne.s32.totalorder %s22, %s24
      %p28 = scmp.eq.s32.totalorder %s14, 0
      %p29 = por %p27, %p28
      %p30 = scmp.ne.s32.totalorder %s22, %s24
      %p31 = scmp.eq.s32.totalorder %s19, 1
      %p32 = por %p30, %p31
      %p33 = scmp.ne.s32.totalorder %s24, %s25
      %p34 = scmp.eq.s32.totalorder %s19, 0
      %p35 = por %p33, %p34
      %p36 = scmp.ne.s32.totalorder %s24, %s25
      %p37 = scmp.eq.s32.totalorder %s20, 1
      %p38 = por %p36, %p37
      %p40 = scmp.ne.s32.totalorder %s25, %s39
      %p41 = scmp.eq.s32.totalorder %s20, 0
      %p42 = por %p40, %p41
      %s44 = sadd.s32 %s43, 1
      %p47 = scmp.eq.s32.totalorder %s14, 1
      %p48 = scmp.ne.s32.totalorder %s43, %s45
      %p49 = scmp.eq.s32.totalorder %s14, 0
      %p50 = por %p48, %p49
      %p51 = scmp.ne.s32.totalorder %s43, %s45
      %p52 = scmp.eq.s32.totalorder %s19, 1
      %p53 = por %p51, %p52
      %p54 = scmp.ne.s32.totalorder %s45, %s46
      %p55 = scmp.eq.s32.totalorder %s19, 0
      %p56 = por %p54, %p55
      %p57 = scmp.ne.s32.totalorder %s45, %s46
      %p58 = scmp.eq.s32.totalorder %s20, 1
      %p59 = por %p57, %p58
      %p61 = scmp.ne.s32.totalorder %s46, %s60
      %p62 = scmp.eq.s32.totalorder %s20, 0
      %p63 = por %p61, %p62
      %s65 = sadd.s32 %s64, 1
      %p68 = scmp.eq.s32.totalorder %s14, 1
      %p69 = scmp.ne.s32.totalorder %s64, %s66
      %p70 = scmp.eq.s32.totalorder %s14, 0
      %p71 = por %p69, %p70
      %p72 = scmp.ne.s32.totalorder %s64, %s66
      %p73 = scmp.eq.s32.totalorder %s19, 1
      %p74 = por %p72, %p73
      %p75 = scmp.ne.s32.totalorder %s66, %s67
      %p76 = scmp.eq.s32.totalorder %s19, 0
      %p77 = por %p75, %p76
      %p78 = scmp.ne.s32.totalorder %s66, %s67
      %p79 = scmp.eq.s32.totalorder %s20, 1
      %p80 = por %p78, %p79
      %p82 = scmp.ne.s32.totalorder %s67, %s81
      %p83 = scmp.eq.s32.totalorder %s20, 0
      %p84 = por %p82, %p83
      %s85 = ssub.s32 %s14, %s21
      %p86 = scmp.eq.s32.totalorder %s85, 0
      %s88 = sadd.s32 %s87, 1
      %s89 = scalar_select %p86, %s87, %s88
      %p92 = pneg %p86
      %p93 = scmp.eq.s32.totalorder %s14, 1
      %p94 = por %p92, %p93
      %p95 = scmp.ne.s32.totalorder %s87, %s90
      %p96 = scmp.eq.s32.totalorder %s14, 0
      %p97 = por %p95, %p96
      %p98 = scmp.ne.s32.totalorder %s87, %s90
      %p99 = scmp.eq.s32.totalorder %s19, 1
      %p100 = por %p98, %p99
      %p101 = scmp.ne.s32.totalorder %s90, %s91
      %p102 = scmp.eq.s32.totalorder %s19, 0
      %p103 = por %p101, %p102
      %p104 = scmp.ne.s32.totalorder %s90, %s91
      %p105 = scmp.eq.s32.totalorder %s20, 1
      %p106 = por %p104, %p105
      %p108 = scmp.ne.s32.totalorder %s91, %s107
      %p109 = scmp.eq.s32.totalorder %s20, 0
      %p110 = por %p108, %p109
      %s111 = ssub.s32 %s14, %s21
      %p112 = scmp.eq.s32.totalorder %s111, 0
      %s114 = sadd.s32 %s113, 1
      %s115 = scalar_select %p112, %s113, %s114
      %p118 = pneg %p112
      %p119 = scmp.eq.s32.totalorder %s14, 1
      %p120 = por %p118, %p119
      %p121 = scmp.ne.s32.totalorder %s113, %s116
      %p122 = scmp.eq.s32.totalorder %s14, 0
      %p123 = por %p121, %p122
      %p124 = scmp.ne.s32.totalorder %s113, %s116
      %p125 = scmp.eq.s32.totalorder %s19, 1
      %p126 = por %p124, %p125
      %p127 = scmp.ne.s32.totalorder %s116, %s117
      %p128 = scmp.eq.s32.totalorder %s19, 0
      %p129 = por %p127, %p128
      %p130 = scmp.ne.s32.totalorder %s116, %s117
      %p131 = scmp.eq.s32.totalorder %s20, 1
      %p132 = por %p130, %p131
      %p134 = scmp.ne.s32.totalorder %s117, %s133
      %p135 = scmp.eq.s32.totalorder %s20, 0
      %p136 = por %p134, %p135
      %p137 = scmp.le.s32.totalorder 1, %s14
      %p138 = scmp.lt.s32.totalorder %s14, 3
      %p139 = pnand %p137, %p138
      %p140 = pneg %p139
      // Predicated region
      $region9: #{tpu_custom_call.1} parent=5 // pred_check
        _
      $region10: #{tpu_custom_call.1} parent=5 // pred_check_branch
        %142 = sbr.rel (%p139) target = $region12
      $region11: #{tpu_custom_call.1} parent=5 // pred_region
        %s143 = ssub.s32 %s14, 1
        // Predicated region
        $region13: #{tpu_custom_call.1} parent=11 // pred_check
          %p144 = pneg %p35
        $region14: #{tpu_custom_call.1} parent=11 // pred_check_branch
          %146 = sbr.rel (%p144) target = $region16
        $region15: #{tpu_custom_call.1} parent=11 // pred_region
          _
        $region16: #{tpu_custom_call.1} parent=11 // pred_fallthru
          _
        // Predicated region
        $region17: #{tpu_custom_call.1} parent=11 // pred_check
          %p147 = pneg %p56
        $region18: #{tpu_custom_call.1} parent=11 // pred_check_branch
          %149 = sbr.rel (%p147) target = $region20
        $region19: #{tpu_custom_call.1} parent=11 // pred_region
          _
        $region20: #{tpu_custom_call.1} parent=11 // pred_fallthru
          _
        // Predicated region
        $region21: #{tpu_custom_call.1} parent=11 // pred_check
          %p150 = pneg %p77
        $region22: #{tpu_custom_call.1} parent=11 // pred_check_branch
          %152 = sbr.rel (%p150) target = $region24
        $region23: #{tpu_custom_call.1} parent=11 // pred_region
          _
        $region24: #{tpu_custom_call.1} parent=11 // pred_fallthru
          _
      $region12: #{tpu_custom_call.1} parent=5 // pred_fallthru
        _
      %p153 = scmp.lt.s32.totalorder %s14, 2
      // Predicated region
      $region25: #{tpu_custom_call.1} parent=5 // pred_check
        %p154 = pneg %p153
      $region26: #{tpu_custom_call.1} parent=5 // pred_check_branch
        %156 = sbr.rel (%p154) target = $region28
      $region27: #{tpu_custom_call.1} parent=5 // pred_region
        // Predicated region
        $region29: #{tpu_custom_call.1} parent=27 // pred_check
          %p157 = pneg %p97
        $region30: #{tpu_custom_call.1} parent=27 // pred_check_branch
          %159 = sbr.rel (%p157) target = $region32
        $region31: #{tpu_custom_call.1} parent=27 // pred_region
          %s160 = smul.u32 16, %s14
          %p161 = scmp.lt.s32.totalorder %s160, 31
          %s162 = scalar_select %p161, %s160, 31
          %s163 = smul.addr %s162, 8
          %s164 = scalar_lea.vmem %s3, %s163
          %s165 = smul.u32 16, %s14
        $region32: #{tpu_custom_call.1} parent=27 // pred_fallthru
          _
      $region28: #{tpu_custom_call.1} parent=5 // pred_fallthru
        _
      %p166 = scmp.le.s32.totalorder 1, %s14
      %p167 = scmp.lt.s32.totalorder %s14, 3
      %p168 = pnand %p166, %p167
      %p169 = pneg %p168
      // Predicated region
      $region33: #{tpu_custom_call.1} parent=5 // pred_check
        _
      $region34: #{tpu_custom_call.1} parent=5 // pred_check_branch
        %171 = sbr.rel (%p168) target = $region36
      $region35: #{tpu_custom_call.1} parent=5 // pred_region
        %s172 = ssub.s32 %s14, 1
        %p173 = pneg %p35
        %p174 = pneg %p32
        %p175 = pneg %p56
        %p176 = pneg %p53
        %p177 = pneg %p77
        %p178 = pneg %p74
        %s179 = smul.u32 16, %s19
        %p180 = scmp.lt.s32.totalorder %s179, 31
        %s181 = scalar_select %p180, %s179, 31
        %s182 = smul.addr %s181, 8
        %s183 = scalar_lea.vmem %s3, %s182
        %p184 = pneg %p103
        %p185 = pneg %p100
        %p186 = pneg %p129
        %p187 = pneg %p126
        %s188 = sand.u32 %s116, 1
        %s189 = scalar_lea.sflag [#allocation4], %s188
        %s190 = sand.u32 %s116, 1
        %s191 = smul.addr %s190, 8
        %s192 = scalar_lea.vmem [#allocation3], %s191
        %s193 = smul.u32 16, %s19
        %p194 = scmp.lt.s32.totalorder %s193, 31
        %s195 = scalar_select %p194, %s193, 31
        %s196 = smul.addr %s195, 8
        %s197 = scalar_lea.vmem %s3, %s196
        %s198 = smul.u32 16, %s19
        %s199 = sld [smem:[#allocation2]]
        %v200 = vld [vmem:[%s1] sm:$0xff]
        %v201 = vld [vmem:[%s197] sm:$0xff]
        %v202 = vld [vmem:[%s197 + $0x8] sm:$0xff]
        %v203 = vld [vmem:[%s197 + $0x10] sm:$0xff]
        %v204 = vld [vmem:[%s197 + $0x18] sm:$0xff]
        %v205 = vld [vmem:[%s197 + $0x20] sm:$0xff]
        %v206 = vld [vmem:[%s197 + $0x28] sm:$0xff]
        %v207 = vld [vmem:[%s197 + $0x30] sm:$0xff]
        %v208 = vld [vmem:[%s197 + $0x38] sm:$0xff]
        %v209 = vld [vmem:[%s197 + $0x40] sm:$0xff]
        %v210 = vld [vmem:[%s197 + $0x48] sm:$0xff]
        %v211 = vld [vmem:[%s197 + $0x50] sm:$0xff]
        %v212 = vld [vmem:[%s197 + $0x58] sm:$0xff]
        %v213 = vld [vmem:[%s197 + $0x60] sm:$0xff]
        %v214 = vld [vmem:[%s197 + $0x68] sm:$0xff]
        %v215 = vld [vmem:[%s197 + $0x70] sm:$0xff]
        %v216 = vld [vmem:[%s197 + $0x78] sm:$0xff]
        %v217 = vld [vmem:[%s2] sm:$0xff]
        %v218 = vmul.f32 %v200, %v200
        %vm219 = vcmask 523264
        %v220 = vsel %vm219, %v218, 0.0
        %221 = vadd.xlane.f32.xlu0 %v220
        %v222 = vpop.xlane.xlu0 %221
        %v223 = vmax.f32 %v222, 1e-24
        %v224 = vrsqrt.pop %v223
        %v225 = vmul.f32 %v200, %v224
        %v226 = vmul.f32 %v222, %v224
        %v227 = vmul.f32 %v201, %v201
        %v228 = vmul.f32 %v202, %v202
        %v229 = vmul.f32 %v203, %v203
        %v230 = vmul.f32 %v204, %v204
        %v231 = vmul.f32 %v205, %v205
        %v232 = vmul.f32 %v206, %v206
        %v233 = vmul.f32 %v207, %v207
        %v234 = vmul.f32 %v208, %v208
        %v235 = vmul.f32 %v209, %v209
        %v236 = vmul.f32 %v210, %v210
        %v237 = vmul.f32 %v211, %v211
        %v238 = vmul.f32 %v212, %v212
        %v239 = vmul.f32 %v213, %v213
        %v240 = vmul.f32 %v214, %v214
        %v241 = vmul.f32 %v215, %v215
        %v242 = vmul.f32 %v216, %v216
        %v243 = vsel %vm219, %v227, 0.0
        %244 = vadd.xlane.f32.xlu0 %v243
        %v245 = vpop.xlane.xlu0 %244
        %v246 = vsel %vm219, %v228, 0.0
        %247 = vadd.xlane.f32.xlu0 %v246
        %v248 = vpop.xlane.xlu0 %247
        %v249 = vsel %vm219, %v229, 0.0
        %250 = vadd.xlane.f32.xlu0 %v249
        %v251 = vpop.xlane.xlu0 %250
        %v252 = vsel %vm219, %v230, 0.0
        %253 = vadd.xlane.f32.xlu0 %v252
        %v254 = vpop.xlane.xlu0 %253
        %v255 = vsel %vm219, %v231, 0.0
        %256 = vadd.xlane.f32.xlu0 %v255
        %v257 = vpop.xlane.xlu0 %256
        %v258 = vsel %vm219, %v232, 0.0
        %259 = vadd.xlane.f32.xlu0 %v258
        %v260 = vpop.xlane.xlu0 %259
        %v261 = vsel %vm219, %v233, 0.0
        %262 = vadd.xlane.f32.xlu0 %v261
        %v263 = vpop.xlane.xlu0 %262
        %v264 = vsel %vm219, %v234, 0.0
        %265 = vadd.xlane.f32.xlu0 %v264
        %v266 = vpop.xlane.xlu0 %265
        %v267 = vsel %vm219, %v235, 0.0
        %268 = vadd.xlane.f32.xlu0 %v267
        %v269 = vpop.xlane.xlu0 %268
        %v270 = vsel %vm219, %v236, 0.0
        %271 = vadd.xlane.f32.xlu0 %v270
        %v272 = vpop.xlane.xlu0 %271
        %v273 = vsel %vm219, %v237, 0.0
        %274 = vadd.xlane.f32.xlu0 %v273
        %v275 = vpop.xlane.xlu0 %274
        %v276 = vsel %vm219, %v238, 0.0
        %277 = vadd.xlane.f32.xlu0 %v276
        %v278 = vpop.xlane.xlu0 %277
        %v279 = vsel %vm219, %v239, 0.0
        %280 = vadd.xlane.f32.xlu0 %v279
        %v281 = vpop.xlane.xlu0 %280
        %v282 = vsel %vm219, %v240, 0.0
        %283 = vadd.xlane.f32.xlu0 %v282
        %v284 = vpop.xlane.xlu0 %283
        %v285 = vsel %vm219, %v241, 0.0
        %286 = vadd.xlane.f32.xlu0 %v285
        %v287 = vpop.xlane.xlu0 %286
        %v288 = vsel %vm219, %v242, 0.0
        %289 = vadd.xlane.f32.xlu0 %v288
        %v290 = vpop.xlane.xlu0 %289
        %v291 = vmax.f32 %v245, 1e-24
        %v292 = vmax.f32 %v248, 1e-24
        %v293 = vmax.f32 %v251, 1e-24
        %v294 = vmax.f32 %v254, 1e-24
        %v295 = vmax.f32 %v257, 1e-24
        %v296 = vmax.f32 %v260, 1e-24
        %v297 = vmax.f32 %v263, 1e-24
        %v298 = vmax.f32 %v266, 1e-24
        %v299 = vmax.f32 %v269, 1e-24
        %v300 = vmax.f32 %v272, 1e-24
        %v301 = vmax.f32 %v275, 1e-24
        %v302 = vmax.f32 %v278, 1e-24
        %v303 = vmax.f32 %v281, 1e-24
        %v304 = vmax.f32 %v284, 1e-24
        %v305 = vmax.f32 %v287, 1e-24
        %v306 = vmax.f32 %v290, 1e-24
        %v307 = vrsqrt.pop %v291
        %v308 = vrsqrt.pop %v292
        %v309 = vrsqrt.pop %v293
        %v310 = vrsqrt.pop %v294
        %v311 = vrsqrt.pop %v295
        %v312 = vrsqrt.pop %v296
        %v313 = vrsqrt.pop %v297
        %v314 = vrsqrt.pop %v298
        %v315 = vrsqrt.pop %v299
        %v316 = vrsqrt.pop %v300
        %v317 = vrsqrt.pop %v301
        %v318 = vrsqrt.pop %v302
        %v319 = vrsqrt.pop %v303
        %v320 = vrsqrt.pop %v304
        %v321 = vrsqrt.pop %v305
        %v322 = vrsqrt.pop %v306
        %v323 = vmul.f32 %v201, %v307
        %v324 = vmul.f32 %v202, %v308
        %v325 = vmul.f32 %v203, %v309
        %v326 = vmul.f32 %v204, %v310
        %v327 = vmul.f32 %v205, %v311
        %v328 = vmul.f32 %v206, %v312
        %v329 = vmul.f32 %v207, %v313
        %v330 = vmul.f32 %v208, %v314
        %v331 = vmul.f32 %v209, %v315
        %v332 = vmul.f32 %v210, %v316
        %v333 = vmul.f32 %v211, %v317
        %v334 = vmul.f32 %v212, %v318
        %v335 = vmul.f32 %v213, %v319
        %v336 = vmul.f32 %v214, %v320
        %v337 = vmul.f32 %v215, %v321
        %v338 = vmul.f32 %v216, %v322
        %v340 = vsel %vm219, %v225, 0
        %v343 = vsel %vm219, %v323, 0
        %v346 = vsel %vm219, %v324, 0
        %v349 = vsel %vm219, %v325, 0
        %v352 = vsel %vm219, %v326, 0
        %v355 = vsel %vm219, %v327, 0
        %v358 = vsel %vm219, %v328, 0
        %v361 = vsel %vm219, %v329, 0
        %v364 = vsel %vm219, %v330, 0
        %v367 = vsel %vm219, %v331, 0
        %v370 = vsel %vm219, %v332, 0
        %v373 = vsel %vm219, %v333, 0
        %v376 = vsel %vm219, %v334, 0
        %v379 = vsel %vm219, %v335, 0
        %v382 = vsel %vm219, %v336, 0
        %v385 = vsel %vm219, %v337, 0
        %v388 = vsel %vm219, %v338, 0
        %390 = vmatprep.subr.mxu0 0.0
        %391 = vmatpush1.xpose.msra.mxu0 %v343
        %392 = vmatprep.subr.mxu0 0.0
        %393 = vmatpush1.xpose.msra.mxu0 %v346
        %394 = vmatprep.subr.mxu0 0.0
        %395 = vmatpush1.xpose.msra.mxu0 %v349
        %396 = vmatprep.subr.mxu0 0.0
        %397 = vmatpush1.xpose.msra.mxu0 %v352
        %398 = vmatprep.subr.mxu0 0.0
        %399 = vmatpush1.xpose.msra.mxu0 %v355
        %400 = vmatprep.subr.mxu0 0.0
        %401 = vmatpush1.xpose.msra.mxu0 %v358
        %402 = vmatprep.subr.mxu0 0.0
        %403 = vmatpush1.xpose.msra.mxu0 %v361
        %404 = vmatprep.subr.mxu0 0.0
        %405 = vmatpush1.xpose.msra.mxu0 %v364
        %406 = vmatprep.subr.mxu0 0.0
        %407 = vmatpush1.xpose.msra.mxu0 %v367
        %408 = vmatprep.subr.mxu0 0.0
        %409 = vmatpush1.xpose.msra.mxu0 %v370
        %410 = vmatprep.subr.mxu0 0.0
        %411 = vmatpush1.xpose.msra.mxu0 %v373
        %412 = vmatprep.subr.mxu0 0.0
        %413 = vmatpush1.xpose.msra.mxu0 %v376
        %414 = vmatprep.subr.mxu0 0.0
        %415 = vmatpush1.xpose.msra.mxu0 %v379
        %416 = vmatprep.subr.mxu0 0.0
        %417 = vmatpush1.xpose.msra.mxu0 %v382
        %418 = vmatprep.subr.mxu0 0.0
        %419 = vmatpush1.xpose.msra.mxu0 %v385
        %420 = vmatprep.subr.mxu0 0.0
        %421 = vmatpush1.xpose.msra.mxu0 %v388
        %422 = vmatprep.subr.mxu0 0.0
        %423 = vmatpush1.xpose.msra.mxu0 0.0
        %424 = vmatprep.subr.mxu0 0.0
        %425 = vmatpush1.xpose.msra.mxu0 0.0
        %426 = vmatprep.subr.mxu0 0.0
        %427 = vmatpush1.xpose.msra.mxu0 0.0
        %428 = vmatprep.subr.mxu0 0.0
        %429 = vmatpush1.xpose.msra.mxu0 0.0
        %430 = vmatprep.subr.mxu0 0.0
        %431 = vmatpush1.xpose.msra.mxu0 0.0
        %432 = vmatprep.subr.mxu0 0.0
        %433 = vmatpush1.xpose.msra.mxu0 0.0
        %434 = vmatprep.subr.mxu0 0.0
        %435 = vmatpush1.xpose.msra.mxu0 0.0
        %436 = vmatprep.subr.mxu0 0.0
        %437 = vmatpush1.xpose.msra.mxu0 0.0
        %438 = vmatprep.subr.mxu0 0.0
        %439 = vmatpush1.xpose.msra.mxu0 0.0
        %440 = vmatprep.subr.mxu0 0.0
        %441 = vmatpush1.xpose.msra.mxu0 0.0
        %442 = vmatprep.subr.mxu0 0.0
        %443 = vmatpush1.xpose.msra.mxu0 0.0
        %444 = vmatprep.subr.mxu0 0.0
        %445 = vmatpush1.xpose.msra.mxu0 0.0
        %446 = vmatprep.subr.mxu0 0.0
        %447 = vmatpush1.xpose.msra.mxu0 0.0
        %448 = vmatprep.subr.mxu0 0.0
        %449 = vmatpush1.xpose.msra.mxu0 0.0
        %450 = vmatprep.subr.mxu0 0.0
        %451 = vmatpush1.xpose.msra.mxu0 0.0
        %452 = vmatprep.subr.mxu0 0.0
        %453 = vmatpush1.xpose.msra.mxu0 0.0
        %454 = vmatprep.mubr.f32.mxu0 0.0
        %455 = vmatmul.mubr.f32.gmra.mrb[0].mxu0 %v340
        %v456 = vpop.f32.mrb[0].mxu0
        %v457 = vadd.f32 0.0, %v456
        %v458 = vpop.f32.mrb[0].mxu0
        %459 = vdwg.mxu0
        %v460 = vmax.f32 %v457, -1.0
        %v461 = vmin.f32 %v460, 1.0
        %v462 = vmul.f32 %v461, %v461
        %v463 = vmul.f32 %v462, 2.0
        %v464 = vsub.f32 %v463, 1.0
        %vm465 = vcmp.le.f32.partialorder %v461, 1.7948966e-09
        %v466 = vsel %vm465, 1, 0
        %v467 = vcvt.s32.f32 %v466
        %v468 = vadd.f32 %v467, 0.0
        %vm469 = vcmp.le.f32.partialorder %v461, -1.0
        %v470 = vsel %vm469, 1, 0
        %v471 = vcvt.s32.f32 %v470
        %v472 = vadd.f32 %v468, %v471
        %v473 = vand.u32 2147483647, %v472
        %v474 = vrcp.pop 2.0
        %v475 = vmul.f32 %v473, %v474
        %v476 = vfloor.f32 %v475
        %v477 = vmul.f32 %v476, 2.0
        %v478 = vsub.f32 %v473, %v477
        %vm479 = vcmp.eq.f32.partialorder %v478, 2.0
        %v480 = vsel %vm479, 0.0, %v478
        %v481 = vand.u32 2147483647, %v480
        %v482 = vand.u32 %v472, 2147483648
        %v483 = vor.u32 %v481, %v482
        %vm484 = vcmp.ne.f32.partialorder %v483, 0.0
        %vm485 = vcmp.lt.f32.partialorder %v483, 0.0
        %vm486 = vmand %vm485, %vm484
        %v487 = vadd.f32 %v483, 2.0
        %v488 = vsel %vm486, %v487, %v483
        %vm489 = vcmp.eq.f32.partialorder %v488, 0.0
        %v490 = vsel %vm489, 1.0, -1.0
        %v491 = vmul.f32 %v490, %v464
        %v492 = vmul.f32 %v472, 2.0
        %v493 = vsub.f32 %v491, %v492
        %v494 = vlaneseq
        %v495 = vand.u32 %v494, 127
        %s496 = smul.u32 %s19, 128
        %v497 = vstv %s496
        %v498 = vadd.s32 %v495, %v497
        %499 = vset.pattern.permute.xlu0 0
        %500 = vperm.xlu0 %499, %v217
        %v501 = vpop.permute.xlu0 %500
        %vm502 = vcmp.eq.s32.totalorder %v498, %v501
        %v503 = vsub.f32 %v493, %v461
        %v504 = vstv %s199
        %v505 = vmul.f32 %v503, %v504
        %v506 = vadd.f32 %v461, %v505
        %v507 = vsel %vm502, %v506, %v461
        %v508 = vmul.f32 %v507, %v226
        %509 = vst [vmem:[%s192] sm:$0xff] %v508
        %s510 = sand.u32 %s116, 1
        %s511 = scalar_lea.sflag [#allocation4], %s510
        %s512 = sand.u32 %s116, 1
        %s513 = smul.addr %s512, 8
        %s514 = scalar_lea.vmem [#allocation3], %s513
        // Predicated region
        $region37: #{tpu_custom_call.1} parent=35 // pred_check
          %p515 = pneg %p126
        $region38: #{tpu_custom_call.1} parent=35 // pred_check_branch
          %517 = sbr.rel (%p515) target = $region40
        $region39: #{tpu_custom_call.1} parent=35 // pred_region
          %s519 = ssub.s32 128, 128
          %520 = vsyncadd %s511, %s519
          %s521 = smul.addr %s19, 128
          %s522 = scalar_lea.hbm %s4, %s521
          %s524 = sshll.u32 %s514, 4
          %s525 = int_to_ptr.vmem [resolvable:$true] %s524
          %527 = dma.vmem_to_hbm [thread:$0]  %s525, 128, %s522, %s511
        $region40: #{tpu_custom_call.1} parent=35 // pred_fallthru
          _
      $region36: #{tpu_custom_call.1} parent=5 // pred_fallthru
        _
      %p528 = scmp.le.s32.totalorder 2, %s14
      // Predicated region
      $region41: #{tpu_custom_call.1} parent=5 // pred_check
        %p529 = pneg %p528
      $region42: #{tpu_custom_call.1} parent=5 // pred_check_branch
        %531 = sbr.rel (%p529) target = $region44
      $region43: #{tpu_custom_call.1} parent=5 // pred_region
        %s532 = ssub.s32 %s14, 2
        // Predicated region
        $region45: #{tpu_custom_call.1} parent=43 // pred_check
          %p533 = pneg %p132
        $region46: #{tpu_custom_call.1} parent=43 // pred_check_branch
          %535 = sbr.rel (%p533) target = $region48
        $region47: #{tpu_custom_call.1} parent=43 // pred_region
          %s536 = sand.u32 %s117, 1
          %s537 = scalar_lea.sflag [#allocation4], %s536
          %s538 = sand.u32 %s117, 1
          %s539 = smul.addr %s538, 8
          %s540 = scalar_lea.vmem [#allocation3], %s539
          %541 = dma.done %s537, 128
        $region48: #{tpu_custom_call.1} parent=43 // pred_fallthru
          _
      $region44: #{tpu_custom_call.1} parent=5 // pred_fallthru
        _
    $region6: #{tpu_custom_call.1} parent=1 // loop_footer
      %s18 = sadd.s32 1, %s14
    $region7: #{tpu_custom_call.1} parent=1 // loop_footer_branch
      %13 = sbr.rel target = $region3
    $region8: #{tpu_custom_call.1} parent=1 // loop_exit
      _
    %542 = vsyncpa [#allocation4], 1
    %s543 = scalar_lea.sflag [#allocation4], 1
    %544 = vsyncpa %s543, 1

</llo_original>
